<compile_context>
chip_gen: v6e
topology: v6e:2x2x1
jax: 0.10.0
libtpu: 0.0.40
codegen_flags: <defaults>
</compile_context>

<pallas_src>
import functools

import jax
import jax.numpy as jnp
from jax.experimental import pallas as pl
from jax.experimental.pallas import tpu as pltpu

_MIB = 1 << 20
_FUSED_INIT_MAX_X_BYTES = 4 * _MIB  # f32 working-copy budget, safe on every gen


# ---------------------------------------------------------------------------
# Tiling helpers
# ---------------------------------------------------------------------------
def _round_up(x, m):
    return ((x + m - 1) // m) * m


def _sublane_multiple(dtype):
    """Native sublane tile: 8 rows for 32-bit, 16 for 16-bit, 32 for 8-bit."""
    return max(8, 32 // jnp.dtype(dtype).itemsize)


def _target_block_bytes():
    """Per-step x-block byte target, generation aware.

    Both kernels are pure HBM streaming (no MXU); the lever is amortizing the
    ~0.35us fixed per-step pipeline overhead.  v7x's ~3.2 TB/s HBM drains a step
    ~2.3x faster than v6e so it wants bigger blocks; v5e saturates its ~0.8 TB/s
    roofline with moderate blocks.
    """
    kind = ""
    try:
        kind = jax.devices()[0].device_kind.lower()
    except Exception:
        pass
    if "v7" in kind:
        return 8 * _MIB
    if "v5" in kind and ("lite" in kind or "v5e" in kind):
        return 2 * _MIB
    return 4 * _MIB


def _choose_tile_b(batch, d, dtype, tile_b=None):
    """Batch-tile rows: ~target bytes of x per step, sublane-aligned for dtype."""
    sub = _sublane_multiple(dtype)
    if tile_b is not None:
        rows = max(sub, (int(tile_b) // sub) * sub)
    else:
        itemsize = jnp.dtype(dtype).itemsize
        rows = _target_block_bytes() // max(1, d * itemsize)
        rows = max(sub, (rows // sub) * sub)
    if rows >= batch:
        return batch  # full-batch block is always layout-legal
    return rows


def _choose_tile_d(d):
    """Feature tile for the init reduction: >=2 lane-aligned tiles when possible
    so the outer 'parallel' grid axis has work for both v7x TensorCores."""
    if d % 128 != 0 or d <= 128:
        return d
    for k in (2, 3, 4, 6, 8):
        if d % k == 0 and (d // k) % 128 == 0:
            return d // k
    return d


# ---------------------------------------------------------------------------
# Kernel 1: streamed data-dependent initialization
#   b_init    = -mean(x, axis=0)
#   logs_init = log(scale / (sqrt(var(x, axis=0)) + 1e-6)) / logscale_factor
# Population variance via pivot-shifted sum / sum-of-squares (avoids the
# E[x^2] - mean^2 cancellation when |mean| >> std).
# Grid: (feature tiles [parallel], batch tiles [arbitrary/reduction]).
# ---------------------------------------------------------------------------
def _init_stats_kernel(x_ref, b_init_ref, logs_init_ref,
                       pivot_ref, sum_ref, sumsq_ref,
                       *, scale, logscale_factor, batch, tile_b, acc_rows):
    bi = pl.program_id(1)
    nb = pl.num_programs(1)

    x = x_ref[...].astype(jnp.float32)

    @pl.when(bi == 0)
    def _():
        # Per-feature pivot = first row of the first block.
        pivot_ref[...] = x[0:1, :]
        sum_ref[...] = jnp.zeros_like(sum_ref)
        sumsq_ref[...] = jnp.zeros_like(sumsq_ref)

    xs = x - pivot_ref[...]

    def _accumulate(xv):
        if acc_rows == 8:
            # Full-vreg VPU adds per step; the 8->1 cross-sublane (XLU) reduce
            # happens once, in the finalize step.
            s = xv.reshape(tile_b // 8, 8, xv.shape[-1]).sum(axis=0)
            s2 = (xv * xv).reshape(tile_b // 8, 8, xv.shape[-1]).sum(axis=0)
        else:
            s = jnp.sum(xv, axis=0, keepdims=True)
            s2 = jnp.sum(xv * xv, axis=0, keepdims=True)
        sum_ref[...] += s
        sumsq_ref[...] += s2

    if batch % tile_b != 0:
        # Only the edge tile pays for the row mask.
        @pl.when(bi < nb - 1)
        def _():
            _accumulate(xs)

        @pl.when(bi == nb - 1)
        def _():
            row = bi * tile_b + jax.lax.broadcasted_iota(jnp.int32, xs.shape, 0)
            _accumulate(jnp.where(row < batch, xs, 0.0))
    else:
        _accumulate(xs)

    @pl.when(bi == nb - 1)
    def _():
        n = jnp.float32(batch)
        mean_s = jnp.sum(sum_ref[...], axis=0, keepdims=True) / n
        var = jnp.maximum(
            jnp.sum(sumsq_ref[...], axis=0, keepdims=True) / n - mean_s * mean_s,
            0.0)
        b_init_ref[...] = -(pivot_ref[...] + mean_s)
        logs_init_ref[...] = (
            jnp.log(scale / (jnp.sqrt(var) + 1e-6)) / logscale_factor)


def compute_data_init(x, scale, logscale_factor, tile_b=None):
    B, D = x.shape
    tb = _choose_tile_b(B, D, x.dtype, tile_b=tile_b)
    td = _choose_tile_d(D)
    acc_rows = 8 if tb % 8 == 0 else 1
    grid = (pl.cdiv(D, td), pl.cdiv(B, tb))

    kernel = functools.partial(
        _init_stats_kernel,
        scale=float(scale), logscale_factor=float(logscale_factor),
        batch=B, tile_b=tb, acc_rows=acc_rows)

    block_bytes = tb * td * jnp.dtype(x.dtype).itemsize
    vmem_limit = max(int(2 * block_bytes + (2 * acc_rows + 5) * td * 4 + 2 * _MIB),
                     32 * _MIB)

    return pl.pallas_call(
        kernel,
        out_shape=(jax.ShapeDtypeStruct((1, D), jnp.float32),
                   jax.ShapeDtypeStruct((1, D), jnp.float32)),
        grid=grid,
        in_specs=[pl.BlockSpec((tb, td), lambda di, bi: (bi, di))],
        out_specs=(pl.BlockSpec((1, td), lambda di, bi: (0, di)),
                   pl.BlockSpec((1, td), lambda di, bi: (0, di))),
        scratch_shapes=[
            pltpu.VMEM((1, td), jnp.float32),         # pivot
            pltpu.VMEM((acc_rows, td), jnp.float32),  # shifted sum
            pltpu.VMEM((acc_rows, td), jnp.float32),  # shifted sum of squares
        ],
        compiler_params=pltpu.CompilerParams(
            dimension_semantics=("parallel", "arbitrary"),
            vmem_limit_bytes=vmem_limit),
    )(x)


# ---------------------------------------------------------------------------
# Kernel 2: elementwise hot path (batch-tiled, HBM-bandwidth bound)
#   forward: y = (x + b_total) * exp(clamp(logs_total, -5, 5))
#   reverse: y =  x * exp(-clamp(logs_total, -5, 5)) - b_total
# dlogdet is x-independent and computed in the wrapper.
# ---------------------------------------------------------------------------
def _apply_kernel(x_ref, b_tot_ref, logs_tot_ref, out_ref, *, reverse):
    logs_c = jnp.clip(logs_tot_ref[...], -5.0, 5.0)
    x = x_ref[...].astype(jnp.float32)
    if reverse:
        y = x * jnp.exp(-logs_c) - b_tot_ref[...]
    else:
        y = (x + b_tot_ref[...]) * jnp.exp(logs_c)
    out_ref[...] = y.astype(out_ref.dtype)


def apply_actnorm(x, b_total, logs_total, reverse, tile_b=None):
    B, D = x.shape
    tb = _choose_tile_b(B, D, x.dtype, tile_b=tile_b)
    grid = (pl.cdiv(B, tb),)
    kernel = functools.partial(_apply_kernel, reverse=bool(reverse))
    param_spec = pl.BlockSpec((1, D), lambda i: (0, 0))  # VMEM-resident rows

    block_bytes = tb * D * jnp.dtype(x.dtype).itemsize
    # 2x double-buffered in + 2x out + param double buffers + slack.
    vmem_limit = max(int(4 * block_bytes + 8 * D * 4 + 2 * _MIB), 32 * _MIB)

    return pl.pallas_call(
        kernel,
        out_shape=jax.ShapeDtypeStruct((B, D), x.dtype),
        grid=grid,
        in_specs=[pl.BlockSpec((tb, D), lambda i: (i, 0)), param_spec, param_spec],
        out_specs=pl.BlockSpec((tb, D), lambda i: (i, 0)),
        compiler_params=pltpu.CompilerParams(
            dimension_semantics=("parallel",),
            vmem_limit_bytes=vmem_limit),
    )(x, b_total, logs_total)


# ---------------------------------------------------------------------------
# Kernel 3: fused one-time init (stats + apply, x VMEM-resident).
# Used only when x fits comfortably in VMEM; drops the init-call HBM traffic
# from 3x B*D to 2x B*D.
# ---------------------------------------------------------------------------
def _fused_init_apply_kernel(x_ref, b_ref, logs_ref,
                             y_ref, b_init_ref, logs_init_ref,
                             *, scale, logscale_factor):
    x = x_ref[...].astype(jnp.float32)
    mean = jnp.mean(x, axis=0, keepdims=True)
    var = jnp.mean(jnp.square(x - mean), axis=0, keepdims=True)
    b_init = -mean
    logs_init = jnp.log(scale / (jnp.sqrt(var) + 1e-6)) / logscale_factor
    b_init_ref[...] = b_init
    logs_init_ref[...] = logs_init
    logs_c = jnp.clip(logs_ref[...] + logs_init, -5.0, 5.0)
    y = (x + (b_ref[...] + b_init)) * jnp.exp(logs_c)
    y_ref[...] = y.astype(y_ref.dtype)


def fused_init_apply(x, b, logs, scale, logscale_factor):
    B, D = x.shape
    kernel = functools.partial(
        _fused_init_apply_kernel,
        scale=float(scale), logscale_factor=float(logscale_factor))
    full = lambda i: (0, 0)
    vmem_limit = max(int(6 * B * D * 4 + 4 * _MIB), 32 * _MIB)
    return pl.pallas_call(
        kernel,
        out_shape=(jax.ShapeDtypeStruct((B, D), x.dtype),
                   jax.ShapeDtypeStruct((1, D), jnp.float32),
                   jax.ShapeDtypeStruct((1, D), jnp.float32)),
        grid=(1,),
        in_specs=[pl.BlockSpec((B, D), full),
                  pl.BlockSpec((1, D), full),
                  pl.BlockSpec((1, D), full)],
        out_specs=(pl.BlockSpec((B, D), full),
                   pl.BlockSpec((1, D), full),
                   pl.BlockSpec((1, D), full)),
        compiler_params=pltpu.CompilerParams(
            dimension_semantics=("arbitrary",),
            vmem_limit_bytes=vmem_limit),
    )(x, b, logs)


# ---------------------------------------------------------------------------
# Thin Python wrapper mirroring the PyTorch module (state kept host-side).
# ---------------------------------------------------------------------------
class ActNorm:
    def __init__(self, n_dim, scale=1.0, logscale_factor=3.0,
                 tile_b=None, fuse_init=True):
        self.n_dim = n_dim
        self.scale = float(scale)
        self.logscale_factor = float(logscale_factor)
        self.tile_b = tile_b            # None -> derived from D/dtype/chip
        self.fuse_init = bool(fuse_init)
        self.data_init = False
        # Deterministic parameter init (matches torch.zeros in __init__).
        self.b = jnp.zeros((1, n_dim), jnp.float32)
        self.logs = jnp.zeros((1, n_dim), jnp.float32)
        self.b_init = jnp.zeros((1, n_dim), jnp.float32)
        self.logs_init = jnp.zeros((1, n_dim), jnp.float32)

    def _pad_cols(self, a, d_pad):
        d = a.shape[-1]
        return a if d == d_pad else jnp.pad(a, ((0, 0), (0, d_pad - d)))

    def __call__(self, inputs, logdet=None, reverse=False):
        assert inputs.ndim == 2 and inputs.shape[-1] == self.n_dim
        D = self.n_dim
        Dp = _round_up(D, 128)          # lane-dense stores; slice back at the end
        x = self._pad_cols(inputs, Dp)

        y = None
        if (not self.data_init) and (not reverse):
            x_f32_bytes = inputs.shape[0] * Dp * 4
            if self.fuse_init and x_f32_bytes <= _FUSED_INIT_MAX_X_BYTES:
                y, b_init_p, logs_init_p = fused_init_apply(
                    x, self._pad_cols(self.b, Dp), self._pad_cols(self.logs, Dp),
                    self.scale, self.logscale_factor)
            else:
                b_init_p, logs_init_p = compute_data_init(
                    x, self.scale, self.logscale_factor, tile_b=self.tile_b)
            self.b_init = b_init_p[:, :D]
            self.logs_init = logs_init_p[:, :D]
            self.data_init = True

        # Tiny (1, D) wrapper-side fusions: halves param DMAs into the kernel.
        b_total = self.b + self.b_init
        logs_total = self.logs + self.logs_init

        if y is None:
            y = apply_actnorm(
                x, self._pad_cols(b_total, Dp), self._pad_cols(logs_total, Dp),
                reverse, tile_b=self.tile_b)

        out = y if Dp == D else y[:, :D]

        if logdet is not None:
            # dlogdet depends only on the (1, D) params -> hoisted out of the kernel.
            dlogdet = jnp.sum(jnp.clip(logs_total, -5.0, 5.0))
            if reverse:
                dlogdet = -dlogdet
            return out, logdet + dlogdet
        return out

    def reset_data_initialization(self):
        self.data_init = False


# ---------------------------------------------------------------------------
# Pure-JAX reference for verification (mirrors the PyTorch forward).
# ---------------------------------------------------------------------------
def _reference_forward(x, b, logs, scale, logscale_factor, logdet):
    mean = jnp.mean(x, axis=0, keepdims=True)
    var = jnp.mean(jnp.square(x - mean), axis=0, keepdims=True)
    b_init = -mean
    logs_init = jnp.log(scale / (jnp.sqrt(var) + 1e-6)) / logscale_factor
    logs_c = jnp.clip(logs + logs_init, -5.0, 5.0)
    y = (x + (b + b_init)) * jnp.exp(logs_c)
    return y, logdet + jnp.sum(logs_c)


if __name__ == "__main__":
    key = jax.random.PRNGKey(0)

    # --- Case 1: fused one-time init + apply, reverse round-trip -----------
    B, D = 8, 128
    x = 2.5 * jax.random.normal(key, (B, D), dtype=jnp.float32) + 0.7
    layer = ActNorm(n_dim=D)
    logdet0 = jnp.float32(0.0)

    y, logdet = layer(x, logdet=logdet0, reverse=False)
    jax.block_until_ready(y)
    jax.block_until_ready(logdet)
    y_ref, logdet_ref = _reference_forward(
        x, layer.b, layer.logs, layer.scale, layer.logscale_factor, logdet0)
    assert jnp.allclose(y, y_ref, atol=1e-4, rtol=1e-4)
    assert jnp.allclose(logdet, logdet_ref, atol=1e-3, rtol=1e-4)

    x_rec, logdet_rt = layer(y, logdet=logdet, reverse=True)
    jax.block_until_ready(x_rec)
    assert jnp.allclose(x_rec, x, atol=1e-3, rtol=1e-4)
    assert jnp.allclose(logdet_rt, logdet0, atol=1e-3)

    # --- Case 2: streamed init, partial edge batch tile (B=20, tb=8) -------
    B2 = 20
    x2 = 1.3 * jax.random.normal(jax.random.PRNGKey(1), (B2, D), jnp.float32) - 0.4
    layer2 = ActNorm(n_dim=D, tile_b=8, fuse_init=False)
    y2, ld2 = layer2(x2, logdet=jnp.float32(0.0), reverse=False)
    jax.block_until_ready(y2)
    y2_ref, ld2_ref = _reference_forward(
        x2, layer2.b, layer2.logs, layer2.scale, layer2.logscale_factor,
        jnp.float32(0.0))
    assert jnp.allclose(y2, y2_ref, atol=1e-4, rtol=1e-4)
    assert jnp.allclose(ld2, ld2_ref, atol=2e-3, rtol=1e-4)

    # --- Case 3: streamed init with 2 feature tiles (parallel axis), nonzero
    #             b/logs parameters, D=256 --------------------------------
    B3, D3 = 24, 256
    x3 = 0.8 * jax.random.normal(jax.random.PRNGKey(2), (B3, D3), jnp.float32) + 2.0
    layer3 = ActNorm(n_dim=D3, tile_b=8, fuse_init=False)
    layer3.b = 0.1 * jax.random.normal(jax.random.PRNGKey(3), (1, D3), jnp.float32)
    layer3.logs = 0.05 * jax.random.normal(jax.random.PRNGKey(4), (1, D3), jnp.float32)
    y3, ld3 = layer3(x3, logdet=jnp.float32(0.0), reverse=False)
    jax.block_until_ready(y3)
    y3_ref, ld3_ref = _reference_forward(
        x3, layer3.b, layer3.logs, layer3.scale, layer3.logscale_factor,
        jnp.float32(0.0))
    assert jnp.allclose(y3, y3_ref, atol=1e-4, rtol=1e-4)
    assert jnp.allclose(ld3, ld3_ref, atol=2e-3, rtol=1e-4)

    print("KERNEL_OK")
</pallas_src>

<mosaic_0001>
module attributes {stable_mosaic.version = 11 : i64} {
  func.func @_fused_init_apply_kernel(%arg0: i32, %arg1: memref<8x128xf32, #tpu.memory_space<vmem>>, %arg2: memref<1x128xf32, #tpu.memory_space<vmem>>, %arg3: memref<1x128xf32, #tpu.memory_space<vmem>>, %arg4: memref<8x128xf32, #tpu.memory_space<vmem>>, %arg5: memref<1x128xf32, #tpu.memory_space<vmem>>, %arg6: memref<1x128xf32, #tpu.memory_space<vmem>>) attributes {dimension_semantics = [#tpu.dimension_semantics<arbitrary>], iteration_bounds = array<i64: 1>, scalar_prefetch = 0 : i64, scratch_operands = 0 : i64, tpu.core_type = #tpu.core_type<tc>, window_params = [{pipeline_mode = #tpu.pipeline_mode<synchronous>, transform_indices = @transform_0, window_bounds = array<i64: 8, 128>}, {pipeline_mode = #tpu.pipeline_mode<synchronous>, transform_indices = @transform_1, window_bounds = array<i64: 1, 128>}, {pipeline_mode = #tpu.pipeline_mode<synchronous>, transform_indices = @transform_2, window_bounds = array<i64: 1, 128>}, {pipeline_mode = #tpu.pipeline_mode<synchronous>, transform_indices = @transform_3, window_bounds = array<i64: 8, 128>}, {pipeline_mode = #tpu.pipeline_mode<synchronous>, transform_indices = @transform_4, window_bounds = array<i64: 1, 128>}, {pipeline_mode = #tpu.pipeline_mode<synchronous>, transform_indices = @transform_5, window_bounds = array<i64: 1, 128>}]} {
    %c0 = arith.constant 0 : index
    %c0_0 = arith.constant 0 : index
    %0 = vector.load %arg1[%c0, %c0_0] : memref<8x128xf32, #tpu.memory_space<vmem>>, vector<8x128xf32>
    %cst = arith.constant dense<0.000000e+00> : vector<128xf32>
    %1 = vector.multi_reduction <add>, %0, %cst [0] : vector<8x128xf32> to vector<128xf32>
    %2 = vector.shape_cast %1 : vector<128xf32> to vector<1x128xf32>
    %cst_1 = arith.constant 8.000000e+00 : f32
    %3 = vector.broadcast %cst_1 : f32 to vector<1x128xf32>
    %4 = arith.divf %2, %3 : vector<1x128xf32>
    %5 = vector.broadcast %4 : vector<1x128xf32> to vector<8x128xf32>
    %6 = arith.subf %0, %5 : vector<8x128xf32>
    %7 = arith.mulf %6, %6 : vector<8x128xf32>
    %cst_2 = arith.constant dense<0.000000e+00> : vector<128xf32>
    %8 = vector.multi_reduction <add>, %7, %cst_2 [0] : vector<8x128xf32> to vector<128xf32>
    %9 = vector.shape_cast %8 : vector<128xf32> to vector<1x128xf32>
    %cst_3 = arith.constant 8.000000e+00 : f32
    %10 = vector.broadcast %cst_3 : f32 to vector<1x128xf32>
    %11 = arith.divf %9, %10 : vector<1x128xf32>
    %cst_4 = arith.constant 0.000000e+00 : f32
    %12 = vector.broadcast %cst_4 : f32 to vector<1x128xf32>
    %13 = arith.subf %12, %4 : vector<1x128xf32>
    %14 = math.sqrt %11 : vector<1x128xf32>
    %cst_5 = arith.constant 9.99999997E-7 : f32
    %15 = vector.broadcast %cst_5 : f32 to vector<1x128xf32>
    %16 = arith.addf %14, %15 : vector<1x128xf32>
    %cst_6 = arith.constant 1.000000e+00 : f32
    %17 = vector.broadcast %cst_6 : f32 to vector<1x128xf32>
    %18 = arith.divf %17, %16 : vector<1x128xf32>
    %19 = math.log %18 : vector<1x128xf32>
    %cst_7 = arith.constant 3.000000e+00 : f32
    %20 = vector.broadcast %cst_7 : f32 to vector<1x128xf32>
    %21 = arith.divf %19, %20 : vector<1x128xf32>
    %c0_8 = arith.constant 0 : index
    %c0_9 = arith.constant 0 : index
    %22 = vector.load %arg5[%c0_8, %c0_9] : memref<1x128xf32, #tpu.memory_space<vmem>>, vector<1x128xf32>
    tpu.vector_store %arg5[%c0_8, %c0_9], %13 {strides = array<i32>} : memref<1x128xf32, #tpu.memory_space<vmem>>, vector<1x128xf32>,
    %c0_10 = arith.constant 0 : index
    %c0_11 = arith.constant 0 : index
    %23 = vector.load %arg6[%c0_10, %c0_11] : memref<1x128xf32, #tpu.memory_space<vmem>>, vector<1x128xf32>
    tpu.vector_store %arg6[%c0_10, %c0_11], %21 {strides = array<i32>} : memref<1x128xf32, #tpu.memory_space<vmem>>, vector<1x128xf32>,
    %c0_12 = arith.constant 0 : index
    %c0_13 = arith.constant 0 : index
    %24 = vector.load %arg3[%c0_12, %c0_13] : memref<1x128xf32, #tpu.memory_space<vmem>>, vector<1x128xf32>
    %25 = arith.addf %24, %21 : vector<1x128xf32>
    %cst_14 = arith.constant -5.000000e+00 : f32
    %cst_15 = arith.constant 5.000000e+00 : f32
    %26 = vector.broadcast %cst_14 : f32 to vector<1x128xf32>
    %27 = arith.maximumf %26, %25 : vector<1x128xf32>
    %28 = vector.broadcast %cst_15 : f32 to vector<1x128xf32>
    %29 = arith.minimumf %28, %27 : vector<1x128xf32>
    %c0_16 = arith.constant 0 : index
    %c0_17 = arith.constant 0 : index
    %30 = vector.load %arg2[%c0_16, %c0_17] : memref<1x128xf32, #tpu.memory_space<vmem>>, vector<1x128xf32>
    %31 = arith.addf %30, %13 : vector<1x128xf32>
    %32 = vector.broadcast %31 : vector<1x128xf32> to vector<8x128xf32>
    %33 = arith.addf %0, %32 : vector<8x128xf32>
    %34 = math.exp %29 : vector<1x128xf32>
    %35 = vector.broadcast %34 : vector<1x128xf32> to vector<8x128xf32>
    %36 = arith.mulf %33, %35 : vector<8x128xf32>
    %c0_18 = arith.constant 0 : index
    %c0_19 = arith.constant 0 : index
    %37 = vector.load %arg4[%c0_18, %c0_19] : memref<8x128xf32, #tpu.memory_space<vmem>>, vector<8x128xf32>
    tpu.vector_store %arg4[%c0_18, %c0_19], %36 {strides = array<i32>} : memref<8x128xf32, #tpu.memory_space<vmem>>, vector<8x128xf32>,
    return
  }
  func.func @transform_0(%arg0: i32) -> (i32, i32) {
    %c0_i32 = arith.constant 0 : i32
    %c0_i32_0 = arith.constant 0 : i32
    %c0_i32_1 = arith.constant 0 : i32
    return %c0_i32, %c0_i32_0 : i32, i32
  }
  func.func @transform_1(%arg0: i32) -> (i32, i32) {
    %c0_i32 = arith.constant 0 : i32
    %c0_i32_0 = arith.constant 0 : i32
    %c0_i32_1 = arith.constant 0 : i32
    return %c0_i32, %c0_i32_0 : i32, i32
  }
  func.func @transform_2(%arg0: i32) -> (i32, i32) {
    %c0_i32 = arith.constant 0 : i32
    %c0_i32_0 = arith.constant 0 : i32
    %c0_i32_1 = arith.constant 0 : i32
    return %c0_i32, %c0_i32_0 : i32, i32
  }
  func.func @transform_3(%arg0: i32) -> (i32, i32) {
    %c0_i32 = arith.constant 0 : i32
    %c0_i32_0 = arith.constant 0 : i32
    %c0_i32_1 = arith.constant 0 : i32
    return %c0_i32, %c0_i32_0 : i32, i32
  }
  func.func @transform_4(%arg0: i32) -> (i32, i32) {
    %c0_i32 = arith.constant 0 : i32
    %c0_i32_0 = arith.constant 0 : i32
    %c0_i32_1 = arith.constant 0 : i32
    return %c0_i32, %c0_i32_0 : i32, i32
  }
  func.func @transform_5(%arg0: i32) -> (i32, i32) {
    %c0_i32 = arith.constant 0 : i32
    %c0_i32_0 = arith.constant 0 : i32
    %c0_i32_1 = arith.constant 0 : i32
    return %c0_i32, %c0_i32_0 : i32, i32
  }
}

</mosaic_0001>

<llo_original>
// kernel: tpu_custom_call.1
$region0: #{tpu_custom_call.1}
  #allocation0 [shape = 'u32[]', space=smem, size = 0x4, offset = 0x4, fixed_abs, tag = 'smem constant byte address 0x4 - core index']
  #allocation1 [shape = 'u32[144,128]{1,0:T(1,128)}', space=vmem, size = 0x12000, scoped, tag = 'internal scratch']
  %s0 = inlined_call_operand.hbm [shape: f32[8,128], index: 0, kind: input, shape index: {}]
  %s1 = inlined_call_operand.vmem [shape: f32[1,128], index: 1, kind: input, shape index: {}]
  %s2 = inlined_call_operand.vmem [shape: f32[1,128], index: 2, kind: input, shape index: {}]
  %s3 = inlined_call_operand.hbm [shape: f32[8,128], index: 3, kind: output, shape index: {0}]
  %s4 = inlined_call_operand.hbm [shape: f32[1,128], index: 4, kind: output, shape index: {1}]
  %s5 = inlined_call_operand.hbm [shape: f32[1,128], index: 5, kind: output, shape index: {2}]
  %6 = xla_tuple %s3, %s4, %s5
  %s7 = sld [smem:[#allocation0]]
  $region42: #{tpu_custom_call.1} parent=0
    _
  %s9 = ssub.s32 1, %s7
  %s10 = scalar_select 0, %s9, %s7
  $region1: #{tpu_custom_call.1} parent=0
    #allocation2 [shape = 'u8[4096]{0}', space=vmem, size = 0x1000, scoped, tag = 'input window, operand 0, single buffered']
    #allocation3 [shape = 's32[1]{0}', space=sflag, size = 0x4, scoped, tag = 'scoped memory for tpu_custom_call.1']
    #allocation4 [shape = 's32[1]{0}', space=sflag, size = 0x4, scoped, tag = 'scoped memory for tpu_custom_call.1']
    #allocation5 [shape = 'u8[4096]{0}', space=vmem, size = 0x1000, scoped, tag = 'output window, operand 0, single buffered']
    #allocation6 [shape = 'u8[512]{0}', space=vmem, size = 0x400, scoped, tag = 'output window, operand 1, single buffered']
    #allocation7 [shape = 's32[1]{0}', space=sflag, size = 0x4, scoped, tag = 'scoped memory for tpu_custom_call.1']
    #allocation8 [shape = 'u8[512]{0}', space=vmem, size = 0x400, scoped, tag = 'output window, operand 2, single buffered']
    %11 = vsyncpa [#allocation3], 0
    %12 = vsyncpa [#allocation4], 0
    %13 = vsyncpa [#allocation7], 0
    // Predicated region
    $region2: #{tpu_custom_call.1} parent=1 // pred_check
      _
    $region3: #{tpu_custom_call.1} parent=1 // pred_check_branch
      %15 = sbr.rel (0) target = $region5
    $region4: #{tpu_custom_call.1} parent=1 // pred_region
      %s17 = ssub.s32 128, 128
      %18 = vsyncadd [#allocation3], %s17
      %s20 = sshll.u32 [#allocation2], 4
      %s21 = int_to_ptr.vmem [resolvable:$true] %s20
      %23 = dma.hbm_to_vmem [thread:$0]  %s0, 128, %s21, [#allocation3]
    $region5: #{tpu_custom_call.1} parent=1 // pred_fallthru
      _
    // Predicated region
    $region6: #{tpu_custom_call.1} parent=1 // pred_check
      _
    $region7: #{tpu_custom_call.1} parent=1 // pred_check_branch
      %25 = sbr.rel (0) target = $region9
    $region8: #{tpu_custom_call.1} parent=1 // pred_region
      _
    $region9: #{tpu_custom_call.1} parent=1 // pred_fallthru
      _
    // Predicated region
    $region10: #{tpu_custom_call.1} parent=1 // pred_check
      _
    $region11: #{tpu_custom_call.1} parent=1 // pred_check_branch
      %27 = sbr.rel (0) target = $region13
    $region12: #{tpu_custom_call.1} parent=1 // pred_region
      _
    $region13: #{tpu_custom_call.1} parent=1 // pred_fallthru
      _
    // Predicated region
    $region14: #{tpu_custom_call.1} parent=1 // pred_check
      _
    $region15: #{tpu_custom_call.1} parent=1 // pred_check_branch
      %29 = sbr.rel (0) target = $region17
    $region16: #{tpu_custom_call.1} parent=1 // pred_region
      %30 = dma.done [#allocation3], 128
    $region17: #{tpu_custom_call.1} parent=1 // pred_fallthru
      _
    %v31 = vld [vmem:[#allocation2] sm:$0xff]
    %v32 = vrot.slane %v31, 4
    %v33 = vadd.f32 %v31, %v32
    %v34 = vrot.slane %v33, 2
    %v35 = vadd.f32 %v33, %v34
    %v36 = vrot.slane %v35, 1
    %v37 = vadd.f32 %v35, %v36
    %v38 = vrcp.pop 8.0
    %v39 = vmul.f32 %v37, %v38
    %v40 = vsub.f32 %v31, %v39
    %v41 = vmul.f32 %v40, %v40
    %v42 = vrot.slane %v41, 4
    %v43 = vadd.f32 %v41, %v42
    %v44 = vrot.slane %v43, 2
    %v45 = vadd.f32 %v43, %v44
    %v46 = vrot.slane %v45, 1
    %v47 = vadd.f32 %v45, %v46
    %v48 = vmul.f32 %v47, %v38
    %v49 = vsub.f32 0.0, %v39
    %v50 = vrsqrt.pop %v48
    %v51 = vmul.f32 %v48, %v50
    %vm52 = vcmp.eq.f32.partialorder %v48, inf
    %v53 = vsel %vm52, %v48, %v51
    %vm54 = vcmp.eq.f32.partialorder %v48, 0.0
    %v55 = vand.u32 %v48, 2147483648
    %v56 = vsel %vm54, %v55, %v53
    %v57 = vadd.f32 %v56, 1e-06
    %v58 = vrcp.pop %v57
    %v59 = vmul.f32 1.0, %v58
    %v60 = vlog2.pop %v59
    %v61 = vmul.f32 %v60, 0.6931472
    %v62 = vrcp.pop 3.0
    %v63 = vmul.f32 %v61, %v62
    %64 = vst [vmem:[#allocation6] sm:$0x1] %v49
    %65 = vst [vmem:[#allocation8] sm:$0x1] %v63
    %v66 = vld [vmem:[%s2] sm:$0x1]
    %v67 = vadd.f32 %v66, %v63
    %v68 = vmax.f32 %v67, -5.0
    %v69 = vmin.f32 %v68, 5.0
    %v70 = vld [vmem:[%s1] sm:$0x1]
    %v71 = vadd.f32 %v70, %v49
    %v73 = vlaneseq
    %v74 = vshrl.u32 %v73, 7
    %v75 = vsub.s32 0, %v74
    %v76 = vrot.slane %v71, %v75
    %v78 = vadd.f32 %v31, %v76
    %v79 = vmul.f32 %v69, 1.442695
    %v80 = vpow.pop %v79
    %v82 = vlaneseq
    %v83 = vshrl.u32 %v82, 7
    %v84 = vsub.s32 0, %v83
    %v85 = vrot.slane %v80, %v84
    %v87 = vmul.f32 %v78, %v85
    %88 = vst [vmem:[#allocation5] sm:$0xff] %v87
    // Predicated region
    $region18: #{tpu_custom_call.1} parent=1 // pred_check
      _
    $region19: #{tpu_custom_call.1} parent=1 // pred_check_branch
      %90 = sbr.rel (0) target = $region21
    $region20: #{tpu_custom_call.1} parent=1 // pred_region
      %s92 = ssub.s32 128, 128
      %93 = vsyncadd [#allocation4], %s92
      %s95 = sshll.u32 [#allocation5], 4
      %s96 = int_to_ptr.vmem [resolvable:$true] %s95
      %98 = dma.vmem_to_hbm [thread:$0]  %s96, 128, %s3, [#allocation4]
    $region21: #{tpu_custom_call.1} parent=1 // pred_fallthru
      _
    // Predicated region
    $region22: #{tpu_custom_call.1} parent=1 // pred_check
      _
    $region23: #{tpu_custom_call.1} parent=1 // pred_check_branch
      %100 = sbr.rel (0) target = $region25
    $region24: #{tpu_custom_call.1} parent=1 // pred_region
      %s102 = ssub.s32 16, 16
      %103 = vsyncadd [#allocation7], %s102
      %s105 = sshll.u32 [#allocation6], 4
      %s106 = int_to_ptr.vmem [resolvable:$true] %s105
      %108 = dma.vmem_to_hbm [thread:$0]  %s106, 16, %s4, [#allocation7]
    $region25: #{tpu_custom_call.1} parent=1 // pred_fallthru
      _
    // Predicated region
    $region26: #{tpu_custom_call.1} parent=1 // pred_check
      _
    $region27: #{tpu_custom_call.1} parent=1 // pred_check_branch
      %110 = sbr.rel (0) target = $region29
    $region28: #{tpu_custom_call.1} parent=1 // pred_region
      %s112 = ssub.s32 16, 16
      %113 = vsyncadd [#allocation7], %s112
      %s115 = sshll.u32 [#allocation8], 4
      %s116 = int_to_ptr.vmem [resolvable:$true] %s115
      %118 = dma.vmem_to_hbm [thread:$0]  %s116, 16, %s5, [#allocation7]
    $region29: #{tpu_custom_call.1} parent=1 // pred_fallthru
      _
    // Predicated region
    $region30: #{tpu_custom_call.1} parent=1 // pred_check
      _
    $region31: #{tpu_custom_call.1} parent=1 // pred_check_branch
      %120 = sbr.rel (0) target = $region33
    $region32: #{tpu_custom_call.1} parent=1 // pred_region
      %121 = dma.done [#allocation4], 128
    $region33: #{tpu_custom_call.1} parent=1 // pred_fallthru
      _
    // Predicated region
    $region34: #{tpu_custom_call.1} parent=1 // pred_check
      _
    $region35: #{tpu_custom_call.1} parent=1 // pred_check_branch
      %123 = sbr.rel (0) target = $region37
    $region36: #{tpu_custom_call.1} parent=1 // pred_region
      %124 = dma.done [#allocation7], 16
    $region37: #{tpu_custom_call.1} parent=1 // pred_fallthru
      _
    // Predicated region
    $region38: #{tpu_custom_call.1} parent=1 // pred_check
      _
    $region39: #{tpu_custom_call.1} parent=1 // pred_check_branch
      %126 = sbr.rel (0) target = $region41
    $region40: #{tpu_custom_call.1} parent=1 // pred_region
      %127 = dma.done [#allocation7], 16
    $region41: #{tpu_custom_call.1} parent=1 // pred_fallthru
      _
    %128 = vsyncpa [#allocation3], 1
    %129 = vsyncpa [#allocation4], 1
    %130 = vsyncpa [#allocation7], 1

</llo_original>
